<compile_context>
chip_gen: v7x
topology: tpu7x:2x2x1
jax: 0.10.0
libtpu: 0.0.40
codegen_flags: <defaults>
</compile_context>

<pallas_src>
import jax
import jax.numpy as jnp
from jax import lax
from jax.experimental import pallas as pl
from jax.experimental.pallas import tpu as pltpu


def _round_up(x, m):
    return ((x + m - 1) // m) * m


def _vmem_capacity_bytes():
    """Physical VMEM per TensorCore; conservative fallback if the query fails."""
    try:
        return int(pltpu.get_tpu_info().vmem_capacity_bytes)
    except Exception:
        return 64 << 20  # v7x has 64 MiB/TC; v5e/v6e have 128 MiB (safe under-estimate)


def _conv1x1_kernel(x_ref, w_ref, b_ref, o_ref):
    """out[b, o, l] = sum_c W[o, c] * x[b, c, l] + bias[o] for one (Bb, tL) tile.

    x_ref: (Bb, C_in, tL)   w_ref: (C_out, C_in)   b_ref: (C_out, 1)
    o_ref: (Bb, C_out, tL)

    Partial-block invariant: the op is elementwise along both b and l (only the
    channel dim is contracted), so garbage read from out-of-bounds rows/lanes of
    a partial block only produces garbage in out-of-bounds rows/lanes of the
    output tile, which Pallas masks on writeback.  A kernel_size>1 (im2col)
    extension would break this and must reintroduce explicit L padding.
    """
    w = w_ref[...]
    bias = b_ref[...]
    nb = x_ref.shape[0]  # static batch-block size

    def one(i):
        acc = jnp.dot(w, x_ref[i], preferred_element_type=jnp.float32)
        o_ref[i] = (acc + bias).astype(o_ref.dtype)

    if nb <= 8:
        for i in range(nb):          # short static unroll
            one(i)
    else:
        def body(i, carry):
            one(i)
            return carry
        lax.fori_loop(0, nb, body, 0)


def motif_embedder_forward(x_ncl, weight, bias, *, l_tile=None, b_tile=None):
    """Conv1d(motif_dim, hidden_dim, kernel_size=1) forward.

    x_ncl:  (B, motif_dim, L)
    weight: (hidden_dim, motif_dim, 1)
    bias:   (hidden_dim,)
    returns (B, hidden_dim, L), matching torch.nn.Conv1d(motif_dim, hidden_dim, 1).
    `l_tile` / `b_tile` override the automatic tiling (used for testing).
    """
    B, C_in, L = x_ncl.shape
    C_out = weight.shape[0]
    assert weight.shape == (C_out, C_in, 1), "only kernel_size=1 is implemented"

    w2 = weight[:, :, 0]            # (C_out, C_in)
    b2 = bias.reshape(C_out, 1)     # (C_out, 1) -> broadcasts across lanes

    itemsize = jnp.dtype(x_ncl.dtype).itemsize
    lane_bytes = (C_in + C_out) * itemsize          # streamed x + out bytes per lane

    # Generation-aware VMEM budget (v7x has only 64 MiB per TensorCore).
    vmem_cap = _vmem_capacity_bytes()
    budget = int(vmem_cap * 0.7)
    resident = 2 * (C_out * C_in + C_out) * itemsize    # double-buffered W, bias
    avail = max(budget - resident, 4 << 20)

    # Per-step streamed-byte target: amortizes ~0.35 us/step pipeline overhead
    # even at v7x HBM bandwidth (~3.2 TB/s => ~1.1 MB of forgone BW per 0.35 us).
    target_step_bytes = 4 << 20

    # ---- L tile (lane axis): as large as the VMEM budget allows --------------
    if l_tile is not None:
        tl = int(l_tile)
    elif L <= 128:
        tl = L                                        # full extent
    else:
        tl_vmem = max(128, (avail // (2 * lane_bytes)) // 128 * 128)
        tl = min(tl_vmem, _round_up(L, 128))
        if tl >= L:
            tl = L                                    # single full-extent tile is legal

    # ---- batch tile: amortize per-step overhead when L tiles are small -------
    if b_tile is not None:
        bb = int(b_tile)
    else:
        step_bytes_1b = max(lane_bytes * tl, 1)
        bb_target = max(1, target_step_bytes // step_bytes_1b)
        bb_vmem = max(1, avail // (2 * step_bytes_1b))
        bb = int(min(B, bb_target, bb_vmem))

        # v7x megacore: keep >= 2 grid steps along a parallel axis so both
        # TensorCores get work (no effect on single-TC v5e/v6e).
        if pl.cdiv(B, bb) * pl.cdiv(L, tl) < 2:
            if B >= 2:
                bb = pl.cdiv(B, 2)
            elif L > 128 and l_tile is None:
                tl = max(128, _round_up(pl.cdiv(L, 2), 128))

    grid = (pl.cdiv(B, bb), pl.cdiv(L, tl))

    # Double-buffered x/out tiles + (double-buffered) resident weight/bias.
    per_step_bytes = (2 * bb * (C_in + C_out) * tl * itemsize
                      + 2 * (C_out * C_in + C_out) * itemsize)
    vmem_limit = int(min(int(vmem_cap * 0.8),
                         max(16 << 20, per_step_bytes + (2 << 20))))

    cost = pl.CostEstimate(
        flops=2 * B * L * C_in * C_out,
        transcendentals=0,
        bytes_accessed=B * (C_in + C_out) * L * itemsize
        + (C_out * C_in + C_out) * jnp.dtype(weight.dtype).itemsize,
    )

    return pl.pallas_call(
        _conv1x1_kernel,
        out_shape=jax.ShapeDtypeStruct((B, C_out, L), x_ncl.dtype),
        grid_spec=pltpu.PrefetchScalarGridSpec(
            num_scalar_prefetch=0,
            grid=grid,
            in_specs=[
                # x: (Bb, C_in, tL) tile; partial blocks allowed along B and L.
                pl.BlockSpec((bb, C_in, tl), lambda b, l: (b, 0, l)),
                # weight / bias: resident across the whole grid.
                pl.BlockSpec((C_out, C_in), lambda b, l: (0, 0)),
                pl.BlockSpec((C_out, 1), lambda b, l: (0, 0)),
            ],
            out_specs=pl.BlockSpec((bb, C_out, tl), lambda b, l: (b, 0, l)),
        ),
        compiler_params=pltpu.CompilerParams(
            dimension_semantics=("parallel", "parallel"),
            vmem_limit_bytes=vmem_limit,
        ),
        cost_estimate=cost,
    )(x_ncl, w2, b2)


if __name__ == "__main__":
    # Small shapes consistent with Conv1d(motif_dim, hidden_dim, kernel_size=1).
    B, motif_dim, hidden_dim, L = 2, 8, 32, 16

    key = jax.random.PRNGKey(0)
    kx, kw, kb = jax.random.split(key, 3)

    x = jax.random.normal(kx, (B, motif_dim, L), dtype=jnp.float32)
    weight = jax.random.normal(kw, (hidden_dim, motif_dim, 1), dtype=jnp.float32) * 0.1
    bias = jax.random.normal(kb, (hidden_dim,), dtype=jnp.float32) * 0.1

    w2 = weight[:, :, 0]

    # 1) Small-L path (auto tiling; batch axis split for >= 2 grid steps).
    out = jax.block_until_ready(motif_embedder_forward(x, weight, bias))
    ref = jnp.einsum("bcl,oc->bol", x, w2) + bias[None, :, None]
    assert out.shape == (B, hidden_dim, L)
    assert jnp.allclose(out, ref, atol=1e-5, rtol=1e-5)

    # 2) Tiled L path with a partial last block (640 = 2*256 + 128-valid tail);
    #    no pad / no output slice.
    L2 = 640
    x2 = jax.random.normal(kx, (B, motif_dim, L2), dtype=jnp.float32)
    out2 = jax.block_until_ready(
        motif_embedder_forward(x2, weight, bias, l_tile=256, b_tile=1))
    ref2 = jnp.einsum("bcl,oc->bol", x2, w2) + bias[None, :, None]
    assert out2.shape == (B, hidden_dim, L2)
    assert jnp.allclose(out2, ref2, atol=1e-5, rtol=1e-5)

    # 3) Batch-blocked small-L path with a partial batch block (B=5 -> blocks 3+2).
    B3 = 5
    x3 = jax.random.normal(kb, (B3, motif_dim, L), dtype=jnp.float32)
    out3 = jax.block_until_ready(motif_embedder_forward(x3, weight, bias))
    ref3 = jnp.einsum("bcl,oc->bol", x3, w2) + bias[None, :, None]
    assert out3.shape == (B3, hidden_dim, L)
    assert jnp.allclose(out3, ref3, atol=1e-5, rtol=1e-5)

    print("KERNEL_OK")
</pallas_src>

<mosaic_0001>
module attributes {stable_mosaic.version = 11 : i64} {
  func.func @_conv1x1_kernel(%arg0: i32, %arg1: i32, %arg2: memref<1x8x16xf32, #tpu.memory_space<vmem>>, %arg3: memref<32x8xf32, #tpu.memory_space<vmem>>, %arg4: memref<32x1xf32, #tpu.memory_space<vmem>>, %arg5: memref<1x32x16xf32, #tpu.memory_space<vmem>>) attributes {dimension_semantics = [#tpu.dimension_semantics<parallel>, #tpu.dimension_semantics<parallel>], iteration_bounds = array<i64: 2, 1>, scalar_prefetch = 0 : i64, scratch_operands = 0 : i64, tpu.core_type = #tpu.core_type<tc>, window_params = [{transform_indices = @transform_0, window_bounds = array<i64: 1, 8, 16>}, {pipeline_mode = #tpu.pipeline_mode<synchronous>, transform_indices = @transform_1, window_bounds = array<i64: 32, 8>}, {pipeline_mode = #tpu.pipeline_mode<synchronous>, transform_indices = @transform_2, window_bounds = array<i64: 32, 1>}, {transform_indices = @transform_3, window_bounds = array<i64: 1, 32, 16>}]} {
    %c0 = arith.constant 0 : index
    %c0_0 = arith.constant 0 : index
    %0 = vector.load %arg3[%c0, %c0_0] : memref<32x8xf32, #tpu.memory_space<vmem>>, vector<32x8xf32>
    %c0_1 = arith.constant 0 : index
    %c0_2 = arith.constant 0 : index
    %1 = vector.load %arg4[%c0_1, %c0_2] : memref<32x1xf32, #tpu.memory_space<vmem>>, vector<32x1xf32>
    %c0_3 = arith.constant 0 : index
    %c0_4 = arith.constant 0 : index
    %c0_5 = arith.constant 0 : index
    %2 = vector.load %arg2[%c0_3, %c0_4, %c0_5] : memref<1x8x16xf32, #tpu.memory_space<vmem>>, vector<1x8x16xf32>
    %3 = vector.shape_cast %2 : vector<1x8x16xf32> to vector<8x16xf32>
    %cst = arith.constant dense<0.000000e+00> : vector<32x16xf32>
    %4 = tpu.matmul %0, %3, %cst {dimension_numbers = #tpu.dot_dimension_numbers<[1], [0], [0], [1], [0, 0, 1, 1], [], []>} : vector<32x8xf32>, vector<8x16xf32>, vector<32x16xf32> -> vector<32x16xf32>
    %5 = vector.broadcast %1 : vector<32x1xf32> to vector<32x16xf32>
    %6 = arith.addf %4, %5 : vector<32x16xf32>
    %c0_6 = arith.constant 0 : index
    %c0_7 = arith.constant 0 : index
    %c0_8 = arith.constant 0 : index
    %7 = vector.load %arg5[%c0_6, %c0_7, %c0_8] : memref<1x32x16xf32, #tpu.memory_space<vmem>>, vector<1x32x16xf32>
    %8 = vector.shape_cast %7 : vector<1x32x16xf32> to vector<32x16xf32>
    %9 = vector.shape_cast %6 : vector<32x16xf32> to vector<1x32x16xf32>
    tpu.vector_store %arg5[%c0_6, %c0_7, %c0_8], %9 {strides = array<i32>} : memref<1x32x16xf32, #tpu.memory_space<vmem>>, vector<1x32x16xf32>,
    return
  }
  func.func @transform_0(%arg0: i32, %arg1: i32) -> (i32, i32, i32) {
    %c0_i32 = arith.constant 0 : i32
    %c0_i32_0 = arith.constant 0 : i32
    return %arg0, %c0_i32, %arg1 : i32, i32, i32
  }
  func.func @transform_1(%arg0: i32, %arg1: i32) -> (i32, i32) {
    %c0_i32 = arith.constant 0 : i32
    %c0_i32_0 = arith.constant 0 : i32
    %c0_i32_1 = arith.constant 0 : i32
    return %c0_i32, %c0_i32_0 : i32, i32
  }
  func.func @transform_2(%arg0: i32, %arg1: i32) -> (i32, i32) {
    %c0_i32 = arith.constant 0 : i32
    %c0_i32_0 = arith.constant 0 : i32
    %c0_i32_1 = arith.constant 0 : i32
    return %c0_i32, %c0_i32_0 : i32, i32
  }
  func.func @transform_3(%arg0: i32, %arg1: i32) -> (i32, i32, i32) {
    %c0_i32 = arith.constant 0 : i32
    %c0_i32_0 = arith.constant 0 : i32
    return %arg0, %c0_i32, %arg1 : i32, i32, i32
  }
}

</mosaic_0001>

<llo_original>
// kernel: tpu_custom_call.1
$region0: #{tpu_custom_call.1}
  #allocation0 [shape = 'u32[]', space=smem, size = 0x4, offset = 0x4, fixed_abs, tag = 'smem constant byte address 0x4 - core index']
  #allocation1 [shape = 'u32[144,128]{1,0:T(1,128)}', space=vmem, size = 0x12000, scoped, tag = 'internal scratch']
  %s0 = inlined_call_operand.vmem [shape: f32[2,8,16], index: 0, kind: input, shape index: {}]
  %s1 = inlined_call_operand.vmem [shape: f32[32,8], index: 1, kind: input, shape index: {}]
  %s2 = inlined_call_operand.vmem [shape: f32[32,1], index: 2, kind: input, shape index: {}]
  %s3 = inlined_call_operand.vmem [shape: f32[2,32,16], index: 3, kind: output, shape index: {}]
  %s4 = sld [smem:[#allocation0]]
  $region45: #{tpu_custom_call.1} parent=0
    _
  %s6 = ssub.s32 1, %s4
  %s7 = scalar_select 0, %s6, %s4
  loop: start=0, step=1, limit=4
  $region2: #{tpu_custom_call.1} parent=0 // loop_pre_header
    _
  $region3: #{tpu_custom_call.1} parent=0 // loop_header
    %s9 = sphi 0, %s13
    %p10 = scmp.ge.s32.totalorder %s9, 4
    %s16 = sphi 0, %s28
    %s17 = sphi 0, %s24
    %s18 = sphi 0, %s16
    %s19 = sphi 0, %s17
    %s20 = sphi 0, %s18
    %s21 = sphi 0, %s19
    %s33 = sphi 0, %s35
    %s36 = sphi 0, %s33
    %s37 = sphi 0, %s36
    %s53 = sphi 0, %s37
    %s57 = sphi 0, %s57
    %s59 = sphi 0, %s57
    %s60 = sphi 0, %s59
    %s74 = sphi 0, %s60
    %s78 = sphi 0, %s78
    %s80 = sphi 0, %s78
    %s81 = sphi 0, %s80
    %s95 = sphi 0, %s81
    %s103 = sphi 0, %s105
    %s106 = sphi 0, %s103
    %s107 = sphi 0, %s106
    %s123 = sphi 0, %s107
  $region4: #{tpu_custom_call.1} parent=0 // loop_header_branch
    %12 = sbr.rel (%p10) target = $region8
  $region5: #{tpu_custom_call.1} parent=0 // loop_body
    %s14 = ssub.s32 %s9, 1
    %s15 = ssub.s32 %s9, 2
    %s22 = sadd.s32 1, %s17
    %p23 = scmp.ge.s32.totalorder %s22, 1
    %s24 = scalar_select %p23, 0, %s22
    %s25 = sadd.s32 1, %s16
    %s26 = scalar_select %p23, %s25, %s16
    %p27 = scmp.ge.s32.totalorder %s26, 2
    %s28 = scalar_select %p27, 0, %s26
    %s29 = ssub.s32 %s16, %s28
    %s30 = ssub.s32 %s17, %s24
    %s31 = sor.u32 %s29, %s30
    %p32 = scmp.eq.s32.totalorder %s31, 0
    %s34 = sadd.s32 %s33, 1
    %s35 = scalar_select %p32, %s33, %s34
    %p38 = pneg %p32
    %p39 = scmp.eq.s32.totalorder %s9, 1
    %p40 = por %p38, %p39
    %p41 = scmp.ne.s32.totalorder %s33, %s36
    %p42 = scmp.eq.s32.totalorder %s9, 0
    %p43 = por %p41, %p42
    %p44 = scmp.ne.s32.totalorder %s33, %s36
    %p45 = scmp.eq.s32.totalorder %s14, 1
    %p46 = por %p44, %p45
    %p47 = scmp.ne.s32.totalorder %s36, %s37
    %p48 = scmp.eq.s32.totalorder %s14, 0
    %p49 = por %p47, %p48
    %p50 = scmp.ne.s32.totalorder %s36, %s37
    %p51 = scmp.eq.s32.totalorder %s15, 1
    %p52 = por %p50, %p51
    %p54 = scmp.ne.s32.totalorder %s37, %s53
    %p55 = scmp.eq.s32.totalorder %s15, 0
    %p56 = por %p54, %p55
    %s58 = sadd.s32 %s57, 1
    %p61 = scmp.eq.s32.totalorder %s9, 1
    %p62 = scmp.ne.s32.totalorder %s57, %s59
    %p63 = scmp.eq.s32.totalorder %s9, 0
    %p64 = por %p62, %p63
    %p65 = scmp.ne.s32.totalorder %s57, %s59
    %p66 = scmp.eq.s32.totalorder %s14, 1
    %p67 = por %p65, %p66
    %p68 = scmp.ne.s32.totalorder %s59, %s60
    %p69 = scmp.eq.s32.totalorder %s14, 0
    %p70 = por %p68, %p69
    %p71 = scmp.ne.s32.totalorder %s59, %s60
    %p72 = scmp.eq.s32.totalorder %s15, 1
    %p73 = por %p71, %p72
    %p75 = scmp.ne.s32.totalorder %s60, %s74
    %p76 = scmp.eq.s32.totalorder %s15, 0
    %p77 = por %p75, %p76
    %s79 = sadd.s32 %s78, 1
    %p82 = scmp.eq.s32.totalorder %s9, 1
    %p83 = scmp.ne.s32.totalorder %s78, %s80
    %p84 = scmp.eq.s32.totalorder %s9, 0
    %p85 = por %p83, %p84
    %p86 = scmp.ne.s32.totalorder %s78, %s80
    %p87 = scmp.eq.s32.totalorder %s14, 1
    %p88 = por %p86, %p87
    %p89 = scmp.ne.s32.totalorder %s80, %s81
    %p90 = scmp.eq.s32.totalorder %s14, 0
    %p91 = por %p89, %p90
    %p92 = scmp.ne.s32.totalorder %s80, %s81
    %p93 = scmp.eq.s32.totalorder %s15, 1
    %p94 = por %p92, %p93
    %p96 = scmp.ne.s32.totalorder %s81, %s95
    %p97 = scmp.eq.s32.totalorder %s15, 0
    %p98 = por %p96, %p97
    %s99 = ssub.s32 %s16, %s28
    %s100 = ssub.s32 %s17, %s24
    %s101 = sor.u32 %s99, %s100
    %p102 = scmp.eq.s32.totalorder %s101, 0
    %s104 = sadd.s32 %s103, 1
    %s105 = scalar_select %p102, %s103, %s104
    %p108 = pneg %p102
    %p109 = scmp.eq.s32.totalorder %s9, 1
    %p110 = por %p108, %p109
    %p111 = scmp.ne.s32.totalorder %s103, %s106
    %p112 = scmp.eq.s32.totalorder %s9, 0
    %p113 = por %p111, %p112
    %p114 = scmp.ne.s32.totalorder %s103, %s106
    %p115 = scmp.eq.s32.totalorder %s14, 1
    %p116 = por %p114, %p115
    %p117 = scmp.ne.s32.totalorder %s106, %s107
    %p118 = scmp.eq.s32.totalorder %s14, 0
    %p119 = por %p117, %p118
    %p120 = scmp.ne.s32.totalorder %s106, %s107
    %p121 = scmp.eq.s32.totalorder %s15, 1
    %p122 = por %p120, %p121
    %p124 = scmp.ne.s32.totalorder %s107, %s123
    %p125 = scmp.eq.s32.totalorder %s15, 0
    %p126 = por %p124, %p125
    %p127 = scmp.le.s32.totalorder 1, %s9
    %p128 = scmp.lt.s32.totalorder %s9, 3
    %p129 = pnand %p127, %p128
    %p130 = pneg %p129
    // Predicated region
    $region9: #{tpu_custom_call.1} parent=5 // pred_check
      _
    $region10: #{tpu_custom_call.1} parent=5 // pred_check_branch
      %132 = sbr.rel (%p129) target = $region12
    $region11: #{tpu_custom_call.1} parent=5 // pred_region
      %s133 = ssub.s32 %s9, 1
      // Predicated region
      $region13: #{tpu_custom_call.1} parent=11 // pred_check
        %p134 = pneg %p70
      $region14: #{tpu_custom_call.1} parent=11 // pred_check_branch
        %136 = sbr.rel (%p134) target = $region16
      $region15: #{tpu_custom_call.1} parent=11 // pred_region
        _
      $region16: #{tpu_custom_call.1} parent=11 // pred_fallthru
        _
      // Predicated region
      $region17: #{tpu_custom_call.1} parent=11 // pred_check
        %p137 = pneg %p91
      $region18: #{tpu_custom_call.1} parent=11 // pred_check_branch
        %139 = sbr.rel (%p137) target = $region20
      $region19: #{tpu_custom_call.1} parent=11 // pred_region
        _
      $region20: #{tpu_custom_call.1} parent=11 // pred_fallthru
        _
    $region12: #{tpu_custom_call.1} parent=5 // pred_fallthru
      _
    %p140 = scmp.lt.s32.totalorder %s9, 2
    // Predicated region
    $region21: #{tpu_custom_call.1} parent=5 // pred_check
      %p141 = pneg %p140
    $region22: #{tpu_custom_call.1} parent=5 // pred_check_branch
      %143 = sbr.rel (%p141) target = $region24
    $region23: #{tpu_custom_call.1} parent=5 // pred_region
      // Predicated region
      $region25: #{tpu_custom_call.1} parent=23 // pred_check
        %p144 = pneg %p43
      $region26: #{tpu_custom_call.1} parent=23 // pred_check_branch
        %146 = sbr.rel (%p144) target = $region28
      $region27: #{tpu_custom_call.1} parent=23 // pred_region
        %p147 = scmp.lt.s32.totalorder %s16, 1
        %s148 = scalar_select %p147, %s16, 1
        %p149 = scmp.lt.s32.totalorder %s17, 0
        %s150 = scalar_select %p149, %s17, 0
        %s151 = sadd.s32 %s150, %s148
        %s152 = smul.addr %s151, 8
        %s153 = scalar_lea.vmem %s0, %s152
      $region28: #{tpu_custom_call.1} parent=23 // pred_fallthru
        _
    $region24: #{tpu_custom_call.1} parent=5 // pred_fallthru
      _
    %p154 = scmp.le.s32.totalorder 1, %s9
    %p155 = scmp.lt.s32.totalorder %s9, 3
    %p156 = pnand %p154, %p155
    %p157 = pneg %p156
    // Predicated region
    $region29: #{tpu_custom_call.1} parent=5 // pred_check
      _
    $region30: #{tpu_custom_call.1} parent=5 // pred_check_branch
      %159 = sbr.rel (%p156) target = $region32
    $region31: #{tpu_custom_call.1} parent=5 // pred_region
      %s160 = ssub.s32 %s9, 1
      %p161 = scmp.lt.s32.totalorder %s18, 1
      %s162 = scalar_select %p161, %s18, 1
      %p163 = scmp.lt.s32.totalorder %s19, 0
      %s164 = scalar_select %p163, %s19, 0
      %s165 = sadd.s32 %s164, %s162
      %s166 = smul.addr %s165, 8
      %s167 = scalar_lea.vmem %s0, %s166
      %p168 = pneg %p49
      %p169 = pneg %p46
      %p170 = pneg %p70
      %p171 = pneg %p67
      %p172 = pneg %p91
      %p173 = pneg %p88
      %p174 = pneg %p119
      %p175 = pneg %p116
      %p176 = scmp.lt.s32.totalorder %s18, 1
      %s177 = scalar_select %p176, %s18, 1
      %p178 = scmp.lt.s32.totalorder %s19, 0
      %s179 = scalar_select %p178, %s19, 0
      %s180 = smul.addr %s177, 4
      %s181 = sadd.s32 %s179, %s180
      %s182 = smul.addr %s181, 8
      %s183 = scalar_lea.vmem %s3, %s182
      %p184 = scmp.lt.s32.totalorder %s18, 1
      %s185 = scalar_select %p184, %s18, 1
      %p186 = scmp.lt.s32.totalorder %s19, 0
      %s187 = scalar_select %p186, %s19, 0
      %s188 = sadd.s32 %s187, %s185
      %s189 = smul.addr %s188, 8
      %s190 = scalar_lea.vmem %s0, %s189
      %p191 = scmp.lt.s32.totalorder %s18, 1
      %s192 = scalar_select %p191, %s18, 1
      %p193 = scmp.lt.s32.totalorder %s19, 0
      %s194 = scalar_select %p193, %s19, 0
      %s195 = smul.addr %s192, 4
      %s196 = sadd.s32 %s194, %s195
      %s197 = smul.addr %s196, 8
      %s198 = scalar_lea.vmem %s3, %s197
      %v199 = vld [vmem:[%s1] sm:$0xff]
      %v200 = vld [vmem:[%s1 + $0x8] sm:$0xff]
      %v201 = vld [vmem:[%s1 + $0x10] sm:$0xff]
      %v202 = vld [vmem:[%s1 + $0x18] sm:$0xff]
      %v203 = vld [vmem:[%s2] sm:$0xff]
      %v204 = vld [vmem:[%s2 + $0x8] sm:$0xff]
      %v205 = vld [vmem:[%s2 + $0x10] sm:$0xff]
      %v206 = vld [vmem:[%s2 + $0x18] sm:$0xff]
      %v207 = vld [vmem:[%s190] sm:$0xff]
      %209 = vset.pattern.permute.xlu0 0
      %210 = vperm.xlu0 %209, %v203
      %v211 = vpop.permute.xlu0 %210
      %214 = vset.pattern.permute.xlu0 0
      %215 = vperm.xlu0 %214, %v204
      %v216 = vpop.permute.xlu0 %215
      %219 = vset.pattern.permute.xlu0 0
      %220 = vperm.xlu0 %219, %v205
      %v221 = vpop.permute.xlu0 %220
      %224 = vset.pattern.permute.xlu0 0
      %225 = vperm.xlu0 %224, %v206
      %v226 = vpop.permute.xlu0 %225
      %vm228 = vcmask 64512
      %v230 = vsel %vm228, %v199, 0
      %v233 = vsel %vm228, %v200, 0
      %v236 = vsel %vm228, %v201, 0
      %v239 = vsel %vm228, %v202, 0
      %241 = vmatprep.subr.mxu0 0.0
      %242 = vmatpush1.msra.mxu0 %v207
      %243 = vmatprep.subr.mxu0 0.0
      %244 = vmatpush1.msra.mxu0 0.0
      %245 = vmatprep.subr.mxu0 0.0
      %246 = vmatpush1.msra.mxu0 0.0
      %247 = vmatprep.subr.mxu0 0.0
      %248 = vmatpush1.msra.mxu0 0.0
      %249 = vmatprep.subr.mxu0 0.0
      %250 = vmatpush1.msra.mxu0 0.0
      %251 = vmatprep.subr.mxu0 0.0
      %252 = vmatpush1.msra.mxu0 0.0
      %253 = vmatprep.subr.mxu0 0.0
      %254 = vmatpush1.msra.mxu0 0.0
      %255 = vmatprep.subr.mxu0 0.0
      %256 = vmatpush1.msra.mxu0 0.0
      %257 = vmatprep.subr.mxu0 0.0
      %258 = vmatpush1.msra.mxu0 0.0
      %259 = vmatprep.subr.mxu0 0.0
      %260 = vmatpush1.msra.mxu0 0.0
      %261 = vmatprep.subr.mxu0 0.0
      %262 = vmatpush1.msra.mxu0 0.0
      %263 = vmatprep.subr.mxu0 0.0
      %264 = vmatpush1.msra.mxu0 0.0
      %265 = vmatprep.subr.mxu0 0.0
      %266 = vmatpush1.msra.mxu0 0.0
      %267 = vmatprep.subr.mxu0 0.0
      %268 = vmatpush1.msra.mxu0 0.0
      %269 = vmatprep.subr.mxu0 0.0
      %270 = vmatpush1.msra.mxu0 0.0
      %271 = vmatprep.subr.mxu0 0.0
      %272 = vmatpush1.msra.mxu0 0.0
      %273 = vmatprep.subr.mxu0 0.0
      %274 = vmatpush1.msra.mxu0 0.0
      %275 = vmatprep.subr.mxu0 0.0
      %276 = vmatpush1.msra.mxu0 0.0
      %277 = vmatprep.subr.mxu0 0.0
      %278 = vmatpush1.msra.mxu0 0.0
      %279 = vmatprep.subr.mxu0 0.0
      %280 = vmatpush1.msra.mxu0 0.0
      %281 = vmatprep.subr.mxu0 0.0
      %282 = vmatpush1.msra.mxu0 0.0
      %283 = vmatprep.subr.mxu0 0.0
      %284 = vmatpush1.msra.mxu0 0.0
      %285 = vmatprep.subr.mxu0 0.0
      %286 = vmatpush1.msra.mxu0 0.0
      %287 = vmatprep.subr.mxu0 0.0
      %288 = vmatpush1.msra.mxu0 0.0
      %289 = vmatprep.subr.mxu0 0.0
      %290 = vmatpush1.msra.mxu0 0.0
      %291 = vmatprep.subr.mxu0 0.0
      %292 = vmatpush1.msra.mxu0 0.0
      %293 = vmatprep.subr.mxu0 0.0
      %294 = vmatpush1.msra.mxu0 0.0
      %295 = vmatprep.subr.mxu0 0.0
      %296 = vmatpush1.msra.mxu0 0.0
      %297 = vmatprep.subr.mxu0 0.0
      %298 = vmatpush1.msra.mxu0 0.0
      %299 = vmatprep.subr.mxu0 0.0
      %300 = vmatpush1.msra.mxu0 0.0
      %301 = vmatprep.subr.mxu0 0.0
      %302 = vmatpush1.msra.mxu0 0.0
      %303 = vmatprep.subr.mxu0 0.0
      %304 = vmatpush1.msra.mxu0 0.0
      %305 = vmatprep.mubr.f32.mxu0 0.0
      %306 = vmatmul.mubr.f32.gmra.mrb[0].mxu0 %v230
      %v307 = vpop.f32.mrb[0].mxu0
      %v308 = vadd.f32 %v211, %v307
      %v309 = vpop.f32.mrb[0].mxu0
      %310 = vmatprep.mubr.f32.mxu0 0.0
      %311 = vmatmul.mubr.f32.gmra.mrb[0].mxu0 %v233
      %v312 = vpop.f32.mrb[0].mxu0
      %v313 = vadd.f32 %v216, %v312
      %v314 = vpop.f32.mrb[0].mxu0
      %315 = vmatprep.mubr.f32.mxu0 0.0
      %316 = vmatmul.mubr.f32.gmra.mrb[0].mxu0 %v236
      %v317 = vpop.f32.mrb[0].mxu0
      %v318 = vadd.f32 %v221, %v317
      %v319 = vpop.f32.mrb[0].mxu0
      %320 = vmatprep.mubr.f32.mxu0 0.0
      %321 = vmatmul.mubr.f32.gmra.mrb[0].mxu0 %v239
      %v322 = vpop.f32.mrb[0].mxu0
      %v323 = vadd.f32 %v226, %v322
      %v324 = vpop.f32.mrb[0].mxu0
      %325 = vdwg.mxu0
      %vm326 = vcmask 130048
      %327 = vst.msk [vmem:[%s198] sm:$0xff] %vm326, %v308
      %328 = vst.msk [vmem:[%s198 + $0x8] sm:$0xff] %vm326, %v313
      %329 = vst.msk [vmem:[%s198 + $0x10] sm:$0xff] %vm326, %v318
      %330 = vst.msk [vmem:[%s198 + $0x18] sm:$0xff] %vm326, %v323
      %p331 = scmp.lt.s32.totalorder %s18, 1
      %s332 = scalar_select %p331, %s18, 1
      %p333 = scmp.lt.s32.totalorder %s19, 0
      %s334 = scalar_select %p333, %s19, 0
      %s335 = smul.addr %s332, 4
      %s336 = sadd.s32 %s334, %s335
      %s337 = smul.addr %s336, 8
      %s338 = scalar_lea.vmem %s3, %s337
      // Predicated region
      $region33: #{tpu_custom_call.1} parent=31 // pred_check
        %p339 = pneg %p116
      $region34: #{tpu_custom_call.1} parent=31 // pred_check_branch
        %341 = sbr.rel (%p339) target = $region36
      $region35: #{tpu_custom_call.1} parent=31 // pred_region
        _
      $region36: #{tpu_custom_call.1} parent=31 // pred_fallthru
        _
    $region32: #{tpu_custom_call.1} parent=5 // pred_fallthru
      _
    %p342 = scmp.le.s32.totalorder 2, %s9
    // Predicated region
    $region37: #{tpu_custom_call.1} parent=5 // pred_check
      %p343 = pneg %p342
    $region38: #{tpu_custom_call.1} parent=5 // pred_check_branch
      %345 = sbr.rel (%p343) target = $region40
    $region39: #{tpu_custom_call.1} parent=5 // pred_region
      %s346 = ssub.s32 %s9, 2
      // Predicated region
      $region41: #{tpu_custom_call.1} parent=39 // pred_check
        %p347 = pneg %p122
      $region42: #{tpu_custom_call.1} parent=39 // pred_check_branch
        %349 = sbr.rel (%p347) target = $region44
      $region43: #{tpu_custom_call.1} parent=39 // pred_region
        %p350 = scmp.lt.s32.totalorder %s20, 1
        %s351 = scalar_select %p350, %s20, 1
        %p352 = scmp.lt.s32.totalorder %s21, 0
        %s353 = scalar_select %p352, %s21, 0
        %s354 = smul.addr %s351, 4
        %s355 = sadd.s32 %s353, %s354
        %s356 = smul.addr %s355, 8
        %s357 = scalar_lea.vmem %s3, %s356
      $region44: #{tpu_custom_call.1} parent=39 // pred_fallthru
        _
    $region40: #{tpu_custom_call.1} parent=5 // pred_fallthru
      _
  $region6: #{tpu_custom_call.1} parent=0 // loop_footer
    %s13 = sadd.s32 1, %s9
  $region7: #{tpu_custom_call.1} parent=0 // loop_footer_branch
    %8 = sbr.rel target = $region3
  $region8: #{tpu_custom_call.1} parent=0 // loop_exit
    _

</llo_original>
